<compile_context>
chip_gen: v7x
topology: tpu7x:2x2x1
jax: 0.10.0
libtpu: 0.0.40
codegen_flags: <defaults>
</compile_context>

<pallas_src>
import functools

import jax
import jax.numpy as jnp
from jax import lax
from jax.experimental import pallas as pl
from jax.experimental.pallas import tpu as pltpu

LANE = 128          # TPU lane width; packed feature dims pad to this.
MAX_B_BLOCK = 512   # batch rows per grid step for training-scale batches.


def _round_up(x, m):
    return ((x + m - 1) // m) * m


def _batch_blocking(B):
    """Pad batch to a bf16-friendly multiple of 16; tile at <=512 rows."""
    b16 = _round_up(max(B, 1), 16)
    b_block = min(b16, MAX_B_BLOCK)
    b_pad = _round_up(b16, b_block)
    return b_pad, b_block


# ---------------------------------------------------------------------------
# Kernels
# ---------------------------------------------------------------------------

def fused_mlp_kernel(x_ref, w1_ref, w2_ref, w3_ref, q_ref):
    """Fused critic block: 3 MXU matmuls, biases folded into the weights.

    x:  (Bb, Din_p)    bf16   (last lane is the 1.0 bias lane)
    W1: (Din_p, H1_p)  bf16   (bias row + ones carrier in pad lanes)
    W2: (H1_p, H2_p)   bf16
    W3: (H2_p, Out_p)  bf16
    q:  (Bb, Out_p)    f32    lane-dense store; pad cols sliced in wrapper.
    """
    h1 = jnp.dot(x_ref[...], w1_ref[...], preferred_element_type=jnp.float32)
    h1 = jnp.maximum(h1, 0.0).astype(jnp.bfloat16)       # ReLU (ones lane stays 1)
    h2 = jnp.dot(h1, w2_ref[...], preferred_element_type=jnp.float32)
    h2 = jnp.maximum(h2, 0.0).astype(jnp.bfloat16)       # ReLU
    q = jnp.dot(h2, w3_ref[...], preferred_element_type=jnp.float32)
    q_ref[...] = q.astype(q_ref.dtype)


def fused_mlp_argmax_kernel(x_ref, w1_ref, w2_ref, w3_ref, act_ref,
                            *, n_agents, act_dim):
    """Same critic chain + in-kernel greedy action selection (act() path).

    act: (Bb, LANE) int32; column a holds agent a's argmax, rest is padding.
    Padded output lanes never participate (segment masks), so all-negative
    Q-values cannot select a padded action.
    """
    h1 = jnp.dot(x_ref[...], w1_ref[...], preferred_element_type=jnp.float32)
    h1 = jnp.maximum(h1, 0.0).astype(jnp.bfloat16)
    h2 = jnp.dot(h1, w2_ref[...], preferred_element_type=jnp.float32)
    h2 = jnp.maximum(h2, 0.0).astype(jnp.bfloat16)
    q = jnp.dot(h2, w3_ref[...], preferred_element_type=jnp.float32)

    bb, out_p = q.shape
    lane = lax.broadcasted_iota(jnp.int32, (bb, out_p), 1)
    out_lane = lax.broadcasted_iota(jnp.int32, act_ref.shape, 1)
    acts = jnp.zeros(act_ref.shape, jnp.int32)
    for a in range(n_agents):                      # tiny static loop
        in_seg = (lane >= a * act_dim) & (lane < (a + 1) * act_dim)
        q_seg = jnp.where(in_seg, q, -jnp.inf)
        m = jnp.max(q_seg, axis=-1, keepdims=True)                  # (Bb,1)
        is_max = in_seg & (q == m)
        within = lane - a * act_dim
        idx = jnp.min(jnp.where(is_max, within, out_p),
                      axis=-1, keepdims=True)                       # first max
        acts = jnp.where(out_lane == a, idx, acts)
    act_ref[...] = acts


# ---------------------------------------------------------------------------
# One-time parameter packing (call once per parameter update, NOT per forward)
# ---------------------------------------------------------------------------

def _block_diag_pad(w, rows_pad, cols_pad, dtype):
    # w: (n_agents, din, dout) -> (rows_pad, cols_pad) block-diagonal.
    n, din, dout = w.shape
    out = jnp.zeros((rows_pad, cols_pad), dtype)
    for a in range(n):
        out = out.at[a * din:(a + 1) * din, a * dout:(a + 1) * dout].set(
            w[a].astype(dtype))
    return out


def pack_params(params):
    """Pack per-agent weights into bias-folded block-diagonal bf16 matrices.

    Returns (w1_p, w2_p, w3_p).  The '+1' in every padded dim guarantees a
    spare pad lane for the ones/bias row even when n*dim is a multiple of 128.
    """
    w1, b1, w2, b2, w3, b3 = params
    n, obs_dim, h1 = w1.shape
    h2 = w2.shape[-1]
    a_dim = w3.shape[-1]

    din_p = _round_up(n * obs_dim + 1, LANE)
    h1_p = _round_up(n * h1 + 1, LANE)
    h2_p = _round_up(n * h2 + 1, LANE)
    out_p = _round_up(n * a_dim, LANE)
    cdt = jnp.bfloat16
    one = jnp.asarray(1.0, cdt)

    w1_p = _block_diag_pad(w1, din_p, h1_p, cdt)
    w1_p = w1_p.at[din_p - 1, : n * h1].set(b1.reshape(n * h1).astype(cdt))
    w1_p = w1_p.at[din_p - 1, h1_p - 1].set(one)     # carry ones lane -> h1

    w2_p = _block_diag_pad(w2, h1_p, h2_p, cdt)
    w2_p = w2_p.at[h1_p - 1, : n * h2].set(b2.reshape(n * h2).astype(cdt))
    w2_p = w2_p.at[h1_p - 1, h2_p - 1].set(one)      # carry ones lane -> h2

    w3_p = _block_diag_pad(w3, h2_p, out_p, cdt)
    w3_p = w3_p.at[h2_p - 1, : n * a_dim].set(b3.reshape(n * a_dim).astype(cdt))
    return (w1_p, w2_p, w3_p)


def _pack_obs(obs, din_p, b_pad):
    # (n_agents, B, obs_dim) -> (b_pad, din_p) bf16 with 1.0 in the bias lane.
    n, B, d = obs.shape
    x = jnp.transpose(obs, (1, 0, 2)).reshape(B, n * d)
    x = jnp.pad(x, ((0, b_pad - B), (0, din_p - n * d)))
    x = x.at[:, din_p - 1].set(1.0)
    return x.astype(jnp.bfloat16)


# ---------------------------------------------------------------------------
# Forward wrappers
# ---------------------------------------------------------------------------

def _common_specs(b_block, din_p, h1_p, h2_p, out_p):
    return [
        pl.BlockSpec((b_block, din_p), lambda i: (i, 0)),   # x: tiled on batch
        pl.BlockSpec((din_p, h1_p), lambda i: (0, 0)),      # weights: resident
        pl.BlockSpec((h1_p, h2_p), lambda i: (0, 0)),
        pl.BlockSpec((h2_p, out_p), lambda i: (0, 0)),
    ]


def multi_agent_q_values(obs, packed_w, act_dim):
    """Per-agent MLP critic.  obs (n_agents,B,obs_dim) -> q (n_agents,B,A)."""
    w1_p, w2_p, w3_p = packed_w
    n_agents, B, _ = obs.shape
    din_p, h1_p = w1_p.shape
    h2_p, out_p = w3_p.shape
    b_pad, b_block = _batch_blocking(B)
    x_p = _pack_obs(obs, din_p, b_pad)

    q_pad = pl.pallas_call(
        fused_mlp_kernel,
        out_shape=jax.ShapeDtypeStruct((b_pad, out_p), jnp.float32),
        grid=(b_pad // b_block,),
        in_specs=_common_specs(b_block, din_p, h1_p, h2_p, out_p),
        out_specs=pl.BlockSpec((b_block, out_p), lambda i: (i, 0)),
        compiler_params=pltpu.CompilerParams(
            dimension_semantics=("parallel",)),
    )(x_p, w1_p, w2_p, w3_p)

    q = q_pad[:B, : n_agents * act_dim].reshape(B, n_agents, act_dim)
    return jnp.transpose(q, (1, 0, 2))


def multi_agent_greedy_actions(obs, packed_w, act_dim):
    """QNetwork.act(epsilon=0): fused critic + in-kernel per-agent argmax."""
    w1_p, w2_p, w3_p = packed_w
    n_agents, B, _ = obs.shape
    din_p, h1_p = w1_p.shape
    h2_p, out_p = w3_p.shape
    b_pad, b_block = _batch_blocking(B)
    x_p = _pack_obs(obs, din_p, b_pad)

    kern = functools.partial(fused_mlp_argmax_kernel,
                             n_agents=n_agents, act_dim=act_dim)
    acts_pad = pl.pallas_call(
        kern,
        out_shape=jax.ShapeDtypeStruct((b_pad, LANE), jnp.int32),
        grid=(b_pad // b_block,),
        in_specs=_common_specs(b_block, din_p, h1_p, h2_p, out_p),
        out_specs=pl.BlockSpec((b_block, LANE), lambda i: (i, 0)),
        compiler_params=pltpu.CompilerParams(
            dimension_semantics=("parallel",)),
    )(x_p, w1_p, w2_p, w3_p)

    return jnp.transpose(acts_pad[:B, :n_agents], (1, 0))   # (n_agents, B)


# ---------------------------------------------------------------------------
# Synthetic params + pure-JAX references
# ---------------------------------------------------------------------------

def init_params(key, n_agents, obs_dim, hidden, act_dim):
    h1, h2 = hidden
    ks = jax.random.split(key, 6)
    s = 0.1
    return (
        s * jax.random.normal(ks[0], (n_agents, obs_dim, h1), jnp.float32),
        s * jax.random.normal(ks[1], (n_agents, 1, h1), jnp.float32),
        s * jax.random.normal(ks[2], (n_agents, h1, h2), jnp.float32),
        s * jax.random.normal(ks[3], (n_agents, 1, h2), jnp.float32),
        s * jax.random.normal(ks[4], (n_agents, h2, act_dim), jnp.float32),
        s * jax.random.normal(ks[5], (n_agents, 1, act_dim), jnp.float32),
    )


def reference_q_values_f32(obs, params):
    w1, b1, w2, b2, w3, b3 = params
    h1 = jnp.maximum(jnp.einsum("abd,adh->abh", obs, w1) + b1, 0.0)
    h2 = jnp.maximum(jnp.einsum("abh,ahk->abk", h1, w2) + b2, 0.0)
    return jnp.einsum("abk,akq->abq", h2, w3) + b3


def reference_q_values_bf16(obs, params):
    """Mirrors the kernel's bf16-operand / f32-accumulate math."""
    w1, b1, w2, b2, w3, b3 = [p.astype(jnp.bfloat16) for p in params]
    x = obs.astype(jnp.bfloat16)
    h1 = jnp.einsum("abd,adh->abh", x, w1,
                    preferred_element_type=jnp.float32) + b1.astype(jnp.float32)
    h1 = jnp.maximum(h1, 0.0).astype(jnp.bfloat16)
    h2 = jnp.einsum("abh,ahk->abk", h1, w2,
                    preferred_element_type=jnp.float32) + b2.astype(jnp.float32)
    h2 = jnp.maximum(h2, 0.0).astype(jnp.bfloat16)
    return jnp.einsum("abk,akq->abq", h2, w3,
                      preferred_element_type=jnp.float32) + b3.astype(jnp.float32)


if __name__ == "__main__":
    # Small shapes consistent with a multi-agent flat-obs DQN critic.
    n_agents = 3
    B = 8          # act()-path latency case; training B handled by batch grid
    obs_dim = 16   # flatdim(obs_space[i])
    hidden = (32, 32)
    act_dim = 8    # flatdim(action_space[i])

    key = jax.random.PRNGKey(0)
    k_obs, k_par = jax.random.split(key)
    obs = jax.random.normal(k_obs, (n_agents, B, obs_dim), jnp.float32)
    params = init_params(k_par, n_agents, obs_dim, hidden, act_dim)

    # Pack once per parameter update (hoisted out of the per-call path).
    packed = jax.tree_util.tree_map(jax.block_until_ready, pack_params(params))

    q_fn = jax.jit(functools.partial(multi_agent_q_values, act_dim=act_dim))
    act_fn = jax.jit(functools.partial(multi_agent_greedy_actions,
                                       act_dim=act_dim))

    q = jax.block_until_ready(q_fn(obs, packed))
    assert q.shape == (n_agents, B, act_dim)

    # Tight check: kernel math matches a reference with identical bf16
    # operands (incl. bf16-rounded biases) and f32 accumulation.
    q_ref_bf16 = reference_q_values_bf16(obs, params)
    err_bf16 = float(jnp.max(jnp.abs(q - q_ref_bf16)))
    assert jnp.allclose(q, q_ref_bf16, atol=5e-4, rtol=5e-4), err_bf16

    # Loose check: forward semantics preserved vs. the pure-f32 module.
    q_ref_f32 = reference_q_values_f32(obs, params)
    err_f32 = float(jnp.max(jnp.abs(q - q_ref_f32)))
    assert jnp.allclose(q, q_ref_f32, atol=5e-2, rtol=5e-2), err_f32

    # Fused act()-path: greedy actions selected inside the kernel.
    actions = jax.block_until_ready(act_fn(obs, packed))
    assert actions.shape == (n_agents, B)
    assert bool(jnp.all(actions == jnp.argmax(q, axis=-1)))

    # TODO(synk): update()/TD targets/MSE/optimizer step and target soft-update
    # are training/optimizer host logic, not a forward hot path; not kernelized.
    print("KERNEL_OK")
</pallas_src>

<mosaic_0001>
module attributes {stable_mosaic.version = 11 : i64} {
  func.func @fused_mlp_kernel(%arg0: i32, %arg1: memref<16x128xbf16, #tpu.memory_space<vmem>>, %arg2: memref<128x128xbf16, #tpu.memory_space<vmem>>, %arg3: memref<128x128xbf16, #tpu.memory_space<vmem>>, %arg4: memref<128x128xbf16, #tpu.memory_space<vmem>>, %arg5: memref<16x128xf32, #tpu.memory_space<vmem>>) attributes {dimension_semantics = [#tpu.dimension_semantics<parallel>], iteration_bounds = array<i64: 1>, scalar_prefetch = 0 : i64, scratch_operands = 0 : i64, tpu.core_type = #tpu.core_type<tc>, window_params = [{transform_indices = @transform_0, window_bounds = array<i64: 16, 128>}, {pipeline_mode = #tpu.pipeline_mode<synchronous>, transform_indices = @transform_1, window_bounds = array<i64: 128, 128>}, {pipeline_mode = #tpu.pipeline_mode<synchronous>, transform_indices = @transform_2, window_bounds = array<i64: 128, 128>}, {pipeline_mode = #tpu.pipeline_mode<synchronous>, transform_indices = @transform_3, window_bounds = array<i64: 128, 128>}, {transform_indices = @transform_4, window_bounds = array<i64: 16, 128>}]} {
    %c0 = arith.constant 0 : index
    %c0_0 = arith.constant 0 : index
    %0 = vector.load %arg1[%c0, %c0_0] : memref<16x128xbf16, #tpu.memory_space<vmem>>, vector<16x128xbf16>
    %c0_1 = arith.constant 0 : index
    %c0_2 = arith.constant 0 : index
    %1 = vector.load %arg2[%c0_1, %c0_2] : memref<128x128xbf16, #tpu.memory_space<vmem>>, vector<128x128xbf16>
    %cst = arith.constant dense<0.000000e+00> : vector<16x128xf32>
    %2 = tpu.matmul %0, %1, %cst {dimension_numbers = #tpu.dot_dimension_numbers<[1], [0], [0], [1], [0, 0, 1, 1], [], []>} : vector<16x128xbf16>, vector<128x128xbf16>, vector<16x128xf32> -> vector<16x128xf32>
    %cst_3 = arith.constant 0.000000e+00 : f32
    %3 = vector.broadcast %cst_3 : f32 to vector<16x128xf32>
    %4 = arith.maximumf %2, %3 : vector<16x128xf32>
    %5 = arith.truncf %4 : vector<16x128xf32> to vector<16x128xbf16>
    %c0_4 = arith.constant 0 : index
    %c0_5 = arith.constant 0 : index
    %6 = vector.load %arg3[%c0_4, %c0_5] : memref<128x128xbf16, #tpu.memory_space<vmem>>, vector<128x128xbf16>
    %cst_6 = arith.constant dense<0.000000e+00> : vector<16x128xf32>
    %7 = tpu.matmul %5, %6, %cst_6 {dimension_numbers = #tpu.dot_dimension_numbers<[1], [0], [0], [1], [0, 0, 1, 1], [], []>} : vector<16x128xbf16>, vector<128x128xbf16>, vector<16x128xf32> -> vector<16x128xf32>
    %cst_7 = arith.constant 0.000000e+00 : f32
    %8 = vector.broadcast %cst_7 : f32 to vector<16x128xf32>
    %9 = arith.maximumf %7, %8 : vector<16x128xf32>
    %10 = arith.truncf %9 : vector<16x128xf32> to vector<16x128xbf16>
    %c0_8 = arith.constant 0 : index
    %c0_9 = arith.constant 0 : index
    %11 = vector.load %arg4[%c0_8, %c0_9] : memref<128x128xbf16, #tpu.memory_space<vmem>>, vector<128x128xbf16>
    %cst_10 = arith.constant dense<0.000000e+00> : vector<16x128xf32>
    %12 = tpu.matmul %10, %11, %cst_10 {dimension_numbers = #tpu.dot_dimension_numbers<[1], [0], [0], [1], [0, 0, 1, 1], [], []>} : vector<16x128xbf16>, vector<128x128xbf16>, vector<16x128xf32> -> vector<16x128xf32>
    %c0_11 = arith.constant 0 : index
    %c0_12 = arith.constant 0 : index
    %13 = vector.load %arg5[%c0_11, %c0_12] : memref<16x128xf32, #tpu.memory_space<vmem>>, vector<16x128xf32>
    tpu.vector_store %arg5[%c0_11, %c0_12], %12 {strides = array<i32>} : memref<16x128xf32, #tpu.memory_space<vmem>>, vector<16x128xf32>,
    return
  }
  func.func @transform_0(%arg0: i32) -> (i32, i32) {
    %c0_i32 = arith.constant 0 : i32
    %c0_i32_0 = arith.constant 0 : i32
    return %arg0, %c0_i32 : i32, i32
  }
  func.func @transform_1(%arg0: i32) -> (i32, i32) {
    %c0_i32 = arith.constant 0 : i32
    %c0_i32_0 = arith.constant 0 : i32
    %c0_i32_1 = arith.constant 0 : i32
    return %c0_i32, %c0_i32_0 : i32, i32
  }
  func.func @transform_2(%arg0: i32) -> (i32, i32) {
    %c0_i32 = arith.constant 0 : i32
    %c0_i32_0 = arith.constant 0 : i32
    %c0_i32_1 = arith.constant 0 : i32
    return %c0_i32, %c0_i32_0 : i32, i32
  }
  func.func @transform_3(%arg0: i32) -> (i32, i32) {
    %c0_i32 = arith.constant 0 : i32
    %c0_i32_0 = arith.constant 0 : i32
    %c0_i32_1 = arith.constant 0 : i32
    return %c0_i32, %c0_i32_0 : i32, i32
  }
  func.func @transform_4(%arg0: i32) -> (i32, i32) {
    %c0_i32 = arith.constant 0 : i32
    %c0_i32_0 = arith.constant 0 : i32
    return %arg0, %c0_i32 : i32, i32
  }
}

</mosaic_0001>

<llo_original>
// kernel: multi_agent_q_values.1
$region0: #{multi_agent_q_values.1}
  #allocation0 [shape = 'u32[]', space=smem, size = 0x4, offset = 0x4, fixed_abs, tag = 'smem constant byte address 0x4 - core index']
  #allocation1 [shape = 'u32[144,128]{1,0:T(1,128)}', space=vmem, size = 0x12000, scoped, tag = 'internal scratch']
  %s0 = inlined_call_operand.vmem [shape: bf16[16,128], index: 0, kind: input, shape index: {}]
  %s1 = inlined_call_operand.vmem [shape: bf16[128,128], index: 1, kind: input, shape index: {}]
  %s2 = inlined_call_operand.hbm [shape: bf16[128,128], index: 2, kind: input, shape index: {}]
  %s3 = inlined_call_operand.hbm [shape: bf16[128,128], index: 3, kind: input, shape index: {}]
  %s4 = inlined_call_operand.vmem [shape: f32[16,128], index: 4, kind: output, shape index: {}]
  %s5 = sld [smem:[#allocation0]]
  $region34: #{multi_agent_q_values.1} parent=0
    _
  %s7 = ssub.s32 1, %s5
  %s8 = scalar_select 0, %s7, %s5
  $region1: #{multi_agent_q_values.1} parent=0
    #allocation2 [shape = 'u8[32768]{0}', space=vmem, size = 0x8000, scoped, tag = 'input window, operand 2, single buffered']
    #allocation3 [shape = 's32[1]{0}', space=sflag, size = 0x4, scoped, tag = 'scoped memory for multi_agent_q_values.1']
    #allocation4 [shape = 'u8[32768]{0}', space=vmem, size = 0x8000, scoped, tag = 'input window, operand 3, single buffered']
    #allocation5 [shape = 's32[1]{0}', space=sflag, size = 0x4, scoped, tag = 'scoped memory for multi_agent_q_values.1']
    %9 = vsyncpa [#allocation3], 0
    %10 = vsyncpa [#allocation5], 0
    // Predicated region
    $region2: #{multi_agent_q_values.1} parent=1 // pred_check
      _
    $region3: #{multi_agent_q_values.1} parent=1 // pred_check_branch
      %12 = sbr.rel (0) target = $region5
    $region4: #{multi_agent_q_values.1} parent=1 // pred_region
      _
    $region5: #{multi_agent_q_values.1} parent=1 // pred_fallthru
      _
    // Predicated region
    $region6: #{multi_agent_q_values.1} parent=1 // pred_check
      _
    $region7: #{multi_agent_q_values.1} parent=1 // pred_check_branch
      %14 = sbr.rel (0) target = $region9
    $region8: #{multi_agent_q_values.1} parent=1 // pred_region
      _
    $region9: #{multi_agent_q_values.1} parent=1 // pred_fallthru
      _
    // Predicated region
    $region10: #{multi_agent_q_values.1} parent=1 // pred_check
      _
    $region11: #{multi_agent_q_values.1} parent=1 // pred_check_branch
      %16 = sbr.rel (0) target = $region13
    $region12: #{multi_agent_q_values.1} parent=1 // pred_region
      %s18 = ssub.s32 1024, 1024
      %19 = vsyncadd [#allocation3], %s18
      %s20 = sshll.u32 [#allocation2], 4
      %s21 = int_to_ptr.vmem [resolvable:$true] %s20
      %26 = dma.hbm_to_vmem [thread:$0]  %s2, 1024, %s21, [#allocation3], 64, 64, 4
    $region13: #{multi_agent_q_values.1} parent=1 // pred_fallthru
      _
    // Predicated region
    $region14: #{multi_agent_q_values.1} parent=1 // pred_check
      _
    $region15: #{multi_agent_q_values.1} parent=1 // pred_check_branch
      %28 = sbr.rel (0) target = $region17
    $region16: #{multi_agent_q_values.1} parent=1 // pred_region
      %s30 = ssub.s32 1024, 1024
      %31 = vsyncadd [#allocation5], %s30
      %s32 = sshll.u32 [#allocation4], 4
      %s33 = int_to_ptr.vmem [resolvable:$true] %s32
      %38 = dma.hbm_to_vmem [thread:$0]  %s3, 1024, %s33, [#allocation5], 64, 64, 4
    $region17: #{multi_agent_q_values.1} parent=1 // pred_fallthru
      _
    // Predicated region
    $region18: #{multi_agent_q_values.1} parent=1 // pred_check
      _
    $region19: #{multi_agent_q_values.1} parent=1 // pred_check_branch
      %40 = sbr.rel (0) target = $region21
    $region20: #{multi_agent_q_values.1} parent=1 // pred_region
      %41 = dma.done [#allocation3], 1024
    $region21: #{multi_agent_q_values.1} parent=1 // pred_fallthru
      _
    // Predicated region
    $region22: #{multi_agent_q_values.1} parent=1 // pred_check
      _
    $region23: #{multi_agent_q_values.1} parent=1 // pred_check_branch
      %43 = sbr.rel (0) target = $region25
    $region24: #{multi_agent_q_values.1} parent=1 // pred_region
      %44 = dma.done [#allocation5], 1024
    $region25: #{multi_agent_q_values.1} parent=1 // pred_fallthru
      _
    %v46 = vld [vmem:[%s0] sm:$0xf]
    %v47 = vld [vmem:[%s0 + $0x4] sm:$0xf]
    %v48 = vld [vmem:[%s1] sm:$0xf]
    %v49 = vld [vmem:[%s1 + $0x4] sm:$0xf]
    %v50 = vld [vmem:[%s1 + $0x8] sm:$0xf]
    %v51 = vld [vmem:[%s1 + $0xc] sm:$0xf]
    %v52 = vld [vmem:[%s1 + $0x10] sm:$0xf]
    %v53 = vld [vmem:[%s1 + $0x14] sm:$0xf]
    %v54 = vld [vmem:[%s1 + $0x18] sm:$0xf]
    %v55 = vld [vmem:[%s1 + $0x1c] sm:$0xf]
    %v56 = vld [vmem:[%s1 + $0x20] sm:$0xf]
    %v57 = vld [vmem:[%s1 + $0x24] sm:$0xf]
    %v58 = vld [vmem:[%s1 + $0x28] sm:$0xf]
    %v59 = vld [vmem:[%s1 + $0x2c] sm:$0xf]
    %v60 = vld [vmem:[%s1 + $0x30] sm:$0xf]
    %v61 = vld [vmem:[%s1 + $0x34] sm:$0xf]
    %v62 = vld [vmem:[%s1 + $0x38] sm:$0xf]
    %v63 = vld [vmem:[%s1 + $0x3c] sm:$0xf]
    %v66 = vunpack.c.l.b16 %v46
    %v67 = vunpack.c.l.b16 %v47
    %v68 = vpack.c.b16 %v67, %v66
    %v86 = vunpack.c.l.b16 %v48
    %v87 = vunpack.c.l.b16 %v49
    %v88 = vunpack.c.l.b16 %v50
    %v89 = vunpack.c.l.b16 %v51
    %v90 = vunpack.c.l.b16 %v52
    %v91 = vunpack.c.l.b16 %v53
    %v92 = vunpack.c.l.b16 %v54
    %v93 = vunpack.c.l.b16 %v55
    %v94 = vunpack.c.l.b16 %v56
    %v95 = vunpack.c.l.b16 %v57
    %v96 = vunpack.c.l.b16 %v58
    %v97 = vunpack.c.l.b16 %v59
    %v98 = vunpack.c.l.b16 %v60
    %v99 = vunpack.c.l.b16 %v61
    %v100 = vunpack.c.l.b16 %v62
    %v101 = vunpack.c.l.b16 %v63
    %v102 = vpack.c.b16 %v87, %v86
    %v103 = vpack.c.b16 %v89, %v88
    %v104 = vpack.c.b16 %v91, %v90
    %v105 = vpack.c.b16 %v93, %v92
    %v106 = vpack.c.b16 %v95, %v94
    %v107 = vpack.c.b16 %v97, %v96
    %v108 = vpack.c.b16 %v99, %v98
    %v109 = vpack.c.b16 %v101, %v100
    %118 = vmatprep.subr.bf16.mxu0 0
    %119 = vmatpush1.bf16.msra.mxu0 %v102
    %120 = vmatprep.subr.bf16.mxu0 0
    %121 = vmatpush1.bf16.msra.mxu0 %v103
    %122 = vmatprep.subr.bf16.mxu0 0
    %123 = vmatpush1.bf16.msra.mxu0 %v104
    %124 = vmatprep.subr.bf16.mxu0 0
    %125 = vmatpush1.bf16.msra.mxu0 %v105
    %126 = vmatprep.subr.bf16.mxu0 0
    %127 = vmatpush1.bf16.msra.mxu0 %v106
    %128 = vmatprep.subr.bf16.mxu0 0
    %129 = vmatpush1.bf16.msra.mxu0 %v107
    %130 = vmatprep.subr.bf16.mxu0 0
    %131 = vmatpush1.bf16.msra.mxu0 %v108
    %132 = vmatprep.subr.bf16.mxu0 0
    %133 = vmatpush1.bf16.msra.mxu0 %v109
    %134 = vmatprep.subr.bf16.mxu0 0
    %135 = vmatpush1.bf16.msra.mxu0 0
    %136 = vmatprep.subr.bf16.mxu0 0
    %137 = vmatpush1.bf16.msra.mxu0 0
    %138 = vmatprep.subr.bf16.mxu0 0
    %139 = vmatpush1.bf16.msra.mxu0 0
    %140 = vmatprep.subr.bf16.mxu0 0
    %141 = vmatpush1.bf16.msra.mxu0 0
    %142 = vmatprep.subr.bf16.mxu0 0
    %143 = vmatpush1.bf16.msra.mxu0 0
    %144 = vmatprep.subr.bf16.mxu0 0
    %145 = vmatpush1.bf16.msra.mxu0 0
    %146 = vmatprep.subr.bf16.mxu0 0
    %147 = vmatpush1.bf16.msra.mxu0 0
    %148 = vmatprep.subr.bf16.mxu0 0
    %149 = vmatpush1.bf16.msra.mxu0 0
    %150 = vmatprep.mubr.bf16.mxu0 0
    %151 = vmatmul.mubr.bf16.gmra.mrb[0].mxu0 %v68
    %v152 = vpop.f32.mrb[0].mxu0
    %v153 = vadd.f32 0.0, %v152
    %v154 = vpop.f32.mrb[0].mxu0
    %v155 = vpop.f32.mrb[0].mxu0
    %v156 = vadd.f32 0.0, %v155
    %v157 = vpop.f32.mrb[0].mxu0
    %158 = vdwg.mxu0
    %v159 = vmax.f32 %v153, 0.0
    %v160 = vmax.f32 %v156, 0.0
    %v161 = vpack.c.bf16 %v160, %v159
    %v162 = vld [vmem:[#allocation2] sm:$0xf]
    %v163 = vld [vmem:[#allocation2 + $0x4] sm:$0xf]
    %v164 = vld [vmem:[#allocation2 + $0x8] sm:$0xf]
    %v165 = vld [vmem:[#allocation2 + $0xc] sm:$0xf]
    %v166 = vld [vmem:[#allocation2 + $0x10] sm:$0xf]
    %v167 = vld [vmem:[#allocation2 + $0x14] sm:$0xf]
    %v168 = vld [vmem:[#allocation2 + $0x18] sm:$0xf]
    %v169 = vld [vmem:[#allocation2 + $0x1c] sm:$0xf]
    %v170 = vld [vmem:[#allocation2 + $0x20] sm:$0xf]
    %v171 = vld [vmem:[#allocation2 + $0x24] sm:$0xf]
    %v172 = vld [vmem:[#allocation2 + $0x28] sm:$0xf]
    %v173 = vld [vmem:[#allocation2 + $0x2c] sm:$0xf]
    %v174 = vld [vmem:[#allocation2 + $0x30] sm:$0xf]
    %v175 = vld [vmem:[#allocation2 + $0x34] sm:$0xf]
    %v176 = vld [vmem:[#allocation2 + $0x38] sm:$0xf]
    %v177 = vld [vmem:[#allocation2 + $0x3c] sm:$0xf]
    %v194 = vunpack.c.l.b16 %v162
    %v195 = vunpack.c.l.b16 %v163
    %v196 = vunpack.c.l.b16 %v164
    %v197 = vunpack.c.l.b16 %v165
    %v198 = vunpack.c.l.b16 %v166
    %v199 = vunpack.c.l.b16 %v167
    %v200 = vunpack.c.l.b16 %v168
    %v201 = vunpack.c.l.b16 %v169
    %v202 = vunpack.c.l.b16 %v170
    %v203 = vunpack.c.l.b16 %v171
    %v204 = vunpack.c.l.b16 %v172
    %v205 = vunpack.c.l.b16 %v173
    %v206 = vunpack.c.l.b16 %v174
    %v207 = vunpack.c.l.b16 %v175
    %v208 = vunpack.c.l.b16 %v176
    %v209 = vunpack.c.l.b16 %v177
    %v210 = vpack.c.b16 %v195, %v194
    %v211 = vpack.c.b16 %v197, %v196
    %v212 = vpack.c.b16 %v199, %v198
    %v213 = vpack.c.b16 %v201, %v200
    %v214 = vpack.c.b16 %v203, %v202
    %v215 = vpack.c.b16 %v205, %v204
    %v216 = vpack.c.b16 %v207, %v206
    %v217 = vpack.c.b16 %v209, %v208
    %226 = vmatprep.subr.bf16.mxu0 0
    %227 = vmatpush1.bf16.msra.mxu0 %v210
    %228 = vmatprep.subr.bf16.mxu0 0
    %229 = vmatpush1.bf16.msra.mxu0 %v211
    %230 = vmatprep.subr.bf16.mxu0 0
    %231 = vmatpush1.bf16.msra.mxu0 %v212
    %232 = vmatprep.subr.bf16.mxu0 0
    %233 = vmatpush1.bf16.msra.mxu0 %v213
    %234 = vmatprep.subr.bf16.mxu0 0
    %235 = vmatpush1.bf16.msra.mxu0 %v214
    %236 = vmatprep.subr.bf16.mxu0 0
    %237 = vmatpush1.bf16.msra.mxu0 %v215
    %238 = vmatprep.subr.bf16.mxu0 0
    %239 = vmatpush1.bf16.msra.mxu0 %v216
    %240 = vmatprep.subr.bf16.mxu0 0
    %241 = vmatpush1.bf16.msra.mxu0 %v217
    %242 = vmatprep.subr.bf16.mxu0 0
    %243 = vmatpush1.bf16.msra.mxu0 0
    %244 = vmatprep.subr.bf16.mxu0 0
    %245 = vmatpush1.bf16.msra.mxu0 0
    %246 = vmatprep.subr.bf16.mxu0 0
    %247 = vmatpush1.bf16.msra.mxu0 0
    %248 = vmatprep.subr.bf16.mxu0 0
    %249 = vmatpush1.bf16.msra.mxu0 0
    %250 = vmatprep.subr.bf16.mxu0 0
    %251 = vmatpush1.bf16.msra.mxu0 0
    %252 = vmatprep.subr.bf16.mxu0 0
    %253 = vmatpush1.bf16.msra.mxu0 0
    %254 = vmatprep.subr.bf16.mxu0 0
    %255 = vmatpush1.bf16.msra.mxu0 0
    %256 = vmatprep.subr.bf16.mxu0 0
    %257 = vmatpush1.bf16.msra.mxu0 0
    %258 = vmatprep.mubr.bf16.mxu0 0
    %259 = vmatmul.mubr.bf16.gmra.mrb[0].mxu0 %v161
    %v260 = vpop.f32.mrb[0].mxu0
    %v261 = vadd.f32 0.0, %v260
    %v262 = vpop.f32.mrb[0].mxu0
    %v263 = vpop.f32.mrb[0].mxu0
    %v264 = vadd.f32 0.0, %v263
    %v265 = vpop.f32.mrb[0].mxu0
    %266 = vdwg.mxu0
    %v267 = vmax.f32 %v261, 0.0
    %v268 = vmax.f32 %v264, 0.0
    %v269 = vpack.c.bf16 %v268, %v267
    %v270 = vld [vmem:[#allocation4] sm:$0xf]
    %v271 = vld [vmem:[#allocation4 + $0x4] sm:$0xf]
    %v272 = vld [vmem:[#allocation4 + $0x8] sm:$0xf]
    %v273 = vld [vmem:[#allocation4 + $0xc] sm:$0xf]
    %v274 = vld [vmem:[#allocation4 + $0x10] sm:$0xf]
    %v275 = vld [vmem:[#allocation4 + $0x14] sm:$0xf]
    %v276 = vld [vmem:[#allocation4 + $0x18] sm:$0xf]
    %v277 = vld [vmem:[#allocation4 + $0x1c] sm:$0xf]
    %v278 = vld [vmem:[#allocation4 + $0x20] sm:$0xf]
    %v279 = vld [vmem:[#allocation4 + $0x24] sm:$0xf]
    %v280 = vld [vmem:[#allocation4 + $0x28] sm:$0xf]
    %v281 = vld [vmem:[#allocation4 + $0x2c] sm:$0xf]
    %v282 = vld [vmem:[#allocation4 + $0x30] sm:$0xf]
    %v283 = vld [vmem:[#allocation4 + $0x34] sm:$0xf]
    %v284 = vld [vmem:[#allocation4 + $0x38] sm:$0xf]
    %v285 = vld [vmem:[#allocation4 + $0x3c] sm:$0xf]
    %v302 = vunpack.c.l.b16 %v270
    %v303 = vunpack.c.l.b16 %v271
    %v304 = vunpack.c.l.b16 %v272
    %v305 = vunpack.c.l.b16 %v273
    %v306 = vunpack.c.l.b16 %v274
    %v307 = vunpack.c.l.b16 %v275
    %v308 = vunpack.c.l.b16 %v276
    %v309 = vunpack.c.l.b16 %v277
    %v310 = vunpack.c.l.b16 %v278
    %v311 = vunpack.c.l.b16 %v279
    %v312 = vunpack.c.l.b16 %v280
    %v313 = vunpack.c.l.b16 %v281
    %v314 = vunpack.c.l.b16 %v282
    %v315 = vunpack.c.l.b16 %v283
    %v316 = vunpack.c.l.b16 %v284
    %v317 = vunpack.c.l.b16 %v285
    %v318 = vpack.c.b16 %v303, %v302
    %v319 = vpack.c.b16 %v305, %v304
    %v320 = vpack.c.b16 %v307, %v306
    %v321 = vpack.c.b16 %v309, %v308
    %v322 = vpack.c.b16 %v311, %v310
    %v323 = vpack.c.b16 %v313, %v312
    %v324 = vpack.c.b16 %v315, %v314
    %v325 = vpack.c.b16 %v317, %v316
    %334 = vmatprep.subr.bf16.mxu0 0
    %335 = vmatpush1.bf16.msra.mxu0 %v318
    %336 = vmatprep.subr.bf16.mxu0 0
    %337 = vmatpush1.bf16.msra.mxu0 %v319
    %338 = vmatprep.subr.bf16.mxu0 0
    %339 = vmatpush1.bf16.msra.mxu0 %v320
    %340 = vmatprep.subr.bf16.mxu0 0
    %341 = vmatpush1.bf16.msra.mxu0 %v321
    %342 = vmatprep.subr.bf16.mxu0 0
    %343 = vmatpush1.bf16.msra.mxu0 %v322
    %344 = vmatprep.subr.bf16.mxu0 0
    %345 = vmatpush1.bf16.msra.mxu0 %v323
    %346 = vmatprep.subr.bf16.mxu0 0
    %347 = vmatpush1.bf16.msra.mxu0 %v324
    %348 = vmatprep.subr.bf16.mxu0 0
    %349 = vmatpush1.bf16.msra.mxu0 %v325
    %350 = vmatprep.subr.bf16.mxu0 0
    %351 = vmatpush1.bf16.msra.mxu0 0
    %352 = vmatprep.subr.bf16.mxu0 0
    %353 = vmatpush1.bf16.msra.mxu0 0
    %354 = vmatprep.subr.bf16.mxu0 0
    %355 = vmatpush1.bf16.msra.mxu0 0
    %356 = vmatprep.subr.bf16.mxu0 0
    %357 = vmatpush1.bf16.msra.mxu0 0
    %358 = vmatprep.subr.bf16.mxu0 0
    %359 = vmatpush1.bf16.msra.mxu0 0
    %360 = vmatprep.subr.bf16.mxu0 0
    %361 = vmatpush1.bf16.msra.mxu0 0
    %362 = vmatprep.subr.bf16.mxu0 0
    %363 = vmatpush1.bf16.msra.mxu0 0
    %364 = vmatprep.subr.bf16.mxu0 0
    %365 = vmatpush1.bf16.msra.mxu0 0
    %366 = vmatprep.mubr.bf16.mxu0 0
    %367 = vmatmul.mubr.bf16.gmra.mrb[0].mxu0 %v269
    %v368 = vpop.f32.mrb[0].mxu0
    %v369 = vadd.f32 0.0, %v368
    %v370 = vpop.f32.mrb[0].mxu0
    %v371 = vpop.f32.mrb[0].mxu0
    %v372 = vadd.f32 0.0, %v371
    %v373 = vpop.f32.mrb[0].mxu0
    %374 = vdwg.mxu0
    %375 = vst [vmem:[%s4] sm:$0xff] %v369
    %376 = vst [vmem:[%s4 + $0x8] sm:$0xff] %v372
    // Predicated region
    $region26: #{multi_agent_q_values.1} parent=1 // pred_check
      _
    $region27: #{multi_agent_q_values.1} parent=1 // pred_check_branch
      %378 = sbr.rel (0) target = $region29
    $region28: #{multi_agent_q_values.1} parent=1 // pred_region
      _
    $region29: #{multi_agent_q_values.1} parent=1 // pred_fallthru
      _
    // Predicated region
    $region30: #{multi_agent_q_values.1} parent=1 // pred_check
      _
    $region31: #{multi_agent_q_values.1} parent=1 // pred_check_branch
      %380 = sbr.rel (0) target = $region33
    $region32: #{multi_agent_q_values.1} parent=1 // pred_region
      _
    $region33: #{multi_agent_q_values.1} parent=1 // pred_fallthru
      _
    %381 = vsyncpa [#allocation3], 1
    %382 = vsyncpa [#allocation5], 1

</llo_original>
